<compile_context>
chip_gen: v7x
topology: tpu7x:2x2x1
jax: 0.10.0
libtpu: 0.0.40
codegen_flags: <defaults>
</compile_context>

<pallas_src>
import jax
import jax.numpy as jnp
import numpy as np
from jax.experimental import pallas as pl
from jax.experimental.pallas import tpu as pltpu

WEIGHT = 0.5   # mixing weight between CE and triplet loss
MARGIN = 0.3   # triplet margin
SMOOTH = 0.1   # label-smoothing constant (dead code in the original forward)


def _make_loss_kernel(num_classes: int, tile_c: int, inv_b: float):
    """Builds the kernel with C, TILE_C and 1/B baked in as compile-time constants."""
    inv_b = float(inv_b)

    def _loss_kernel(scores_ref, feats_ref, lab_col_ref, lab_row_ref, out_ref,
                     m_ref, s_ref, t_ref):
        c = pl.program_id(0)
        last_c = pl.num_programs(0) - 1

        # ---------------- init running CE state ----------------
        @pl.when(c == 0)
        def _():
            m_ref[...] = jnp.full(m_ref.shape, -jnp.inf, jnp.float32)
            s_ref[...] = jnp.zeros(s_ref.shape, jnp.float32)
            t_ref[...] = jnp.zeros(t_ref.shape, jnp.float32)

        # ---------------- online logsumexp over this class tile ----------------
        blk = scores_ref[...].astype(jnp.float32)            # (B, tile_c)
        B = blk.shape[0]
        lab_col = lab_col_ref[...]                            # (B, 1) int32

        col = jax.lax.broadcasted_iota(jnp.int32, (B, tile_c), 1) + c * tile_c
        valid = col < num_classes                             # mask padded edge tile
        masked = jnp.where(valid, blk, -jnp.inf)

        m_old = m_ref[...]
        m_new = jnp.maximum(m_old, jnp.max(masked, axis=1, keepdims=True))
        scale = jnp.exp(m_old - m_new)                        # 0 on the first tile
        s_ref[...] = s_ref[...] * scale + jnp.sum(
            jnp.exp(masked - m_new), axis=1, keepdims=True)
        m_ref[...] = m_new

        # running label-logit pick (no onehot materialization)
        match = col == lab_col                                # labels are in [0, C)
        t_ref[...] += jnp.sum(jnp.where(match, blk, 0.0), axis=1, keepdims=True)

        # ---------------- finalize: CE + batch-hard triplet ----------------
        @pl.when(c == last_c)
        def _():
            lse = m_ref[...] + jnp.log(s_ref[...])            # (B, 1)
            loss1 = jnp.sum(lse - t_ref[...]) * inv_b

            feats = feats_ref[...].astype(jnp.float32)        # (B, D)
            sq = jnp.sum(feats * feats, axis=1, keepdims=True)         # (B, 1)
            gram = jax.lax.dot_general(                        # feats @ feats.T
                feats, feats, (((1,), (1,)), ((), ())),
                preferred_element_type=jnp.float32)            # (B, B)
            dist2 = jnp.maximum(sq + jnp.transpose(sq) - 2.0 * gram,
                                jnp.float32(1e-12))            # (B, B)

            # same-label mask: pure VPU broadcast compare (no MXU, no onehot)
            same = lab_col == lab_row_ref[...]                 # (B, B) bool

            # sqrt is monotone -> take max/min on squared distances, sqrt 2B values
            d2_ap = jnp.max(jnp.where(same, dist2, -jnp.inf), axis=1, keepdims=True)
            d2_an = jnp.min(jnp.where(same, jnp.inf, dist2), axis=1, keepdims=True)
            dist_ap = jnp.sqrt(d2_ap)
            dist_an = jnp.sqrt(d2_an)
            loss2 = jnp.sum(
                jnp.maximum(dist_ap - dist_an + jnp.float32(MARGIN), 0.0)) * inv_b

            # Scalars go out through SMEM (no padded VMEM tile / masked store).
            out_ref[0] = (1.0 - WEIGHT) * loss1 + WEIGHT * loss2
            out_ref[1] = loss1
            out_ref[2] = loss2

    return _loss_kernel


def loss_forward(scores, features, labels):
    """scores: (B, C) f32, features: (B, D) f32, labels: (B,) int -> (3,) f32
       [combined loss, loss1 (CE), loss2 (triplet)]."""
    B, C = scores.shape
    D = features.shape[1]
    labels = labels.astype(jnp.int32)
    lab_col = labels.reshape(B, 1)
    lab_row = labels.reshape(1, B)

    # Class tiling: stream scores in lane-aligned tiles when C allows it; otherwise a
    # single full-C block (last-dim == full array dim satisfies the layout rule).
    if C % 128 == 0:
        tile_c = min(C, 512)
    else:
        tile_c = C
    num_c = pl.cdiv(C, tile_c)

    cost = pl.CostEstimate(
        flops=2 * B * B * D + 8 * B * C + 12 * B * B,   # gram + CE elementwise + mask
        transcendentals=B * C + 3 * B,                  # exp, log, 2B sqrt
        bytes_accessed=4 * (B * C + B * D + 2 * B + 3),
    )

    out = pl.pallas_call(
        _make_loss_kernel(C, tile_c, 1.0 / B),
        out_shape=jax.ShapeDtypeStruct((3,), jnp.float32),
        grid=(num_c,),
        in_specs=[
            pl.BlockSpec((B, tile_c), lambda c: (0, c)),   # scores: streamed over C
            pl.BlockSpec((B, D), lambda c: (0, 0)),        # features: resident
            pl.BlockSpec((B, 1), lambda c: (0, 0)),        # labels column: resident
            pl.BlockSpec((1, B), lambda c: (0, 0)),        # labels row: resident
        ],
        out_specs=pl.BlockSpec((3,), lambda c: (0,),
                               memory_space=pltpu.MemorySpace.SMEM),
        scratch_shapes=[
            pltpu.VMEM((B, 1), jnp.float32),   # running max
            pltpu.VMEM((B, 1), jnp.float32),   # running scaled exp-sum
            pltpu.VMEM((B, 1), jnp.float32),   # running label logit
        ],
        compiler_params=pltpu.CompilerParams(
            dimension_semantics=("arbitrary",)),
        cost_estimate=cost,
    )(scores, features, lab_col, lab_row)
    return out  # (3,): [combined, loss1, loss2]


def _reference(scores, features, labels):
    """Pure-JAX reference mirroring the PyTorch semantics."""
    B, C = scores.shape
    logp = jax.nn.log_softmax(scores, axis=1)
    loss1 = -jnp.mean(logp[jnp.arange(B), labels])
    sq = jnp.sum(features ** 2, axis=1, keepdims=True)
    dist = jnp.sqrt(jnp.maximum(sq + sq.T - 2.0 * features @ features.T, 1e-12))
    same = labels[:, None] == labels[None, :]
    dist_ap = jnp.max(jnp.where(same, dist, -jnp.inf), axis=1)
    dist_an = jnp.min(jnp.where(same, jnp.inf, dist), axis=1)
    loss2 = jnp.mean(jnp.maximum(dist_ap - dist_an + MARGIN, 0.0))
    return (1.0 - WEIGHT) * loss1 + WEIGHT * loss2, loss1, loss2


if __name__ == "__main__":
    B, C, D = 8, 40, 32   # C=40 matches the `smooth / 39` hint (40 classes)
    key = jax.random.PRNGKey(0)
    k1, k2 = jax.random.split(key)
    scores = jax.random.normal(k1, (B, C), dtype=jnp.float32)
    features = jax.random.normal(k2, (B, D), dtype=jnp.float32)
    # deterministic labels with both positives and negatives per anchor
    labels = jnp.array([0, 1, 2, 3, 0, 1, 2, 3], dtype=jnp.int32)

    out = jax.block_until_ready(loss_forward(scores, features, labels))
    loss, loss1, loss2 = float(out[0]), float(out[1]), float(out[2])
    # TODO(synk): the original forward prints from inside the module; done host-side here.
    print(loss1, loss2)  # mirrors the `print(loss1.item(), loss2.item())` side effect

    ref_loss, ref1, ref2 = _reference(scores, features, labels)
    np.testing.assert_allclose(loss, float(ref_loss), rtol=1e-5, atol=1e-5)
    np.testing.assert_allclose(loss1, float(ref1), rtol=1e-5, atol=1e-5)
    np.testing.assert_allclose(loss2, float(ref2), rtol=1e-5, atol=1e-5)

    print("KERNEL_OK")
</pallas_src>

<mosaic_0001>
module attributes {stable_mosaic.version = 11 : i64} {
  func.func @_loss_kernel(%arg0: i32, %arg1: memref<8x40xf32, #tpu.memory_space<vmem>>, %arg2: memref<8x32xf32, #tpu.memory_space<vmem>>, %arg3: memref<8x1xi32, #tpu.memory_space<vmem>>, %arg4: memref<1x8xi32, #tpu.memory_space<vmem>>, %arg5: memref<3xf32, #tpu.memory_space<smem>>, %arg6: memref<8x1xf32, #tpu.memory_space<vmem>>, %arg7: memref<8x1xf32, #tpu.memory_space<vmem>>, %arg8: memref<8x1xf32, #tpu.memory_space<vmem>>) attributes {dimension_semantics = [#tpu.dimension_semantics<arbitrary>], iteration_bounds = array<i64: 1>, scalar_prefetch = 0 : i64, scratch_operands = 3 : i64, tpu.core_type = #tpu.core_type<tc>, window_params = [{transform_indices = @transform_0, window_bounds = array<i64: 8, 40>}, {pipeline_mode = #tpu.pipeline_mode<synchronous>, transform_indices = @transform_1, window_bounds = array<i64: 8, 32>}, {pipeline_mode = #tpu.pipeline_mode<synchronous>, transform_indices = @transform_2, window_bounds = array<i64: 8, 1>}, {pipeline_mode = #tpu.pipeline_mode<synchronous>, transform_indices = @transform_3, window_bounds = array<i64: 1, 8>}, {transform_indices = @transform_4, window_bounds = array<i64: 3>}]} {
    %c0_i32 = arith.constant 0 : i32
    %0 = arith.cmpi eq, %arg0, %c0_i32 : i32
    %1 = arith.extui %0 : i1 to i32
    %c0_i32_0 = arith.constant 0 : i32
    %2 = arith.cmpi ne, %1, %c0_i32_0 : i32
    scf.if %2 {
      %cst_23 = arith.constant 0xFF800000 : f32
      %41 = vector.broadcast %cst_23 : f32 to vector<8x1xf32>
      %c0_24 = arith.constant 0 : index
      %c0_25 = arith.constant 0 : index
      %42 = vector.load %arg6[%c0_24, %c0_25] : memref<8x1xf32, #tpu.memory_space<vmem>>, vector<8x1xf32>
      tpu.vector_store %arg6[%c0_24, %c0_25], %41 {strides = array<i32>} : memref<8x1xf32, #tpu.memory_space<vmem>>, vector<8x1xf32>,
      %cst_26 = arith.constant 0.000000e+00 : f32
      %43 = vector.broadcast %cst_26 : f32 to vector<8x1xf32>
      %c0_27 = arith.constant 0 : index
      %c0_28 = arith.constant 0 : index
      %44 = vector.load %arg7[%c0_27, %c0_28] : memref<8x1xf32, #tpu.memory_space<vmem>>, vector<8x1xf32>
      tpu.vector_store %arg7[%c0_27, %c0_28], %43 {strides = array<i32>} : memref<8x1xf32, #tpu.memory_space<vmem>>, vector<8x1xf32>,
      %cst_29 = arith.constant 0.000000e+00 : f32
      %45 = vector.broadcast %cst_29 : f32 to vector<8x1xf32>
      %c0_30 = arith.constant 0 : index
      %c0_31 = arith.constant 0 : index
      %46 = vector.load %arg8[%c0_30, %c0_31] : memref<8x1xf32, #tpu.memory_space<vmem>>, vector<8x1xf32>
      tpu.vector_store %arg8[%c0_30, %c0_31], %45 {strides = array<i32>} : memref<8x1xf32, #tpu.memory_space<vmem>>, vector<8x1xf32>,
    } else {
    }
    %c0 = arith.constant 0 : index
    %c0_1 = arith.constant 0 : index
    %3 = vector.load %arg1[%c0, %c0_1] : memref<8x40xf32, #tpu.memory_space<vmem>>, vector<8x40xf32>
    %c0_2 = arith.constant 0 : index
    %c0_3 = arith.constant 0 : index
    %4 = vector.load %arg3[%c0_2, %c0_3] : memref<8x1xi32, #tpu.memory_space<vmem>>, vector<8x1xi32>
    %5 = tpu.iota {dimensions = array<i32: 1>} : vector<8x40xi32>
    %c40_i32 = arith.constant 40 : i32
    %6 = arith.muli %arg0, %c40_i32 : i32
    %7 = vector.broadcast %6 : i32 to vector<8x40xi32>
    %8 = arith.addi %5, %7 : vector<8x40xi32>
    %c40_i32_4 = arith.constant 40 : i32
    %9 = vector.broadcast %c40_i32_4 : i32 to vector<8x40xi32>
    %10 = arith.cmpi slt, %8, %9 : vector<8x40xi32>
    %cst = arith.constant 0xFF800000 : f32
    %11 = vector.broadcast %cst : f32 to vector<8x40xf32>
    %12 = arith.select %10, %3, %11 : vector<8x40xi1>, vector<8x40xf32>
    %c0_5 = arith.constant 0 : index
    %c0_6 = arith.constant 0 : index
    %13 = vector.load %arg6[%c0_5, %c0_6] : memref<8x1xf32, #tpu.memory_space<vmem>>, vector<8x1xf32>
    %cst_7 = arith.constant dense<0xFF800000> : vector<8xf32>
    %14 = vector.multi_reduction <maximumf>, %12, %cst_7 [1] : vector<8x40xf32> to vector<8xf32>
    %15 = vector.shape_cast %14 : vector<8xf32> to vector<8x1xf32>
    %16 = arith.maximumf %13, %15 : vector<8x1xf32>
    %17 = arith.subf %13, %16 : vector<8x1xf32>
    %18 = math.exp %17 : vector<8x1xf32>
    %c0_8 = arith.constant 0 : index
    %c0_9 = arith.constant 0 : index
    %19 = vector.load %arg7[%c0_8, %c0_9] : memref<8x1xf32, #tpu.memory_space<vmem>>, vector<8x1xf32>
    %20 = arith.mulf %19, %18 : vector<8x1xf32>
    %21 = vector.broadcast %16 : vector<8x1xf32> to vector<8x40xf32>
    %22 = arith.subf %12, %21 : vector<8x40xf32>
    %23 = math.exp %22 : vector<8x40xf32>
    %cst_10 = arith.constant dense<0.000000e+00> : vector<8xf32>
    %24 = vector.multi_reduction <add>, %23, %cst_10 [1] : vector<8x40xf32> to vector<8xf32>
    %25 = vector.shape_cast %24 : vector<8xf32> to vector<8x1xf32>
    %26 = arith.addf %20, %25 : vector<8x1xf32>
    %c0_11 = arith.constant 0 : index
    %c0_12 = arith.constant 0 : index
    %27 = vector.load %arg7[%c0_11, %c0_12] : memref<8x1xf32, #tpu.memory_space<vmem>>, vector<8x1xf32>
    tpu.vector_store %arg7[%c0_11, %c0_12], %26 {strides = array<i32>} : memref<8x1xf32, #tpu.memory_space<vmem>>, vector<8x1xf32>,
    %c0_13 = arith.constant 0 : index
    %c0_14 = arith.constant 0 : index
    %28 = vector.load %arg6[%c0_13, %c0_14] : memref<8x1xf32, #tpu.memory_space<vmem>>, vector<8x1xf32>
    tpu.vector_store %arg6[%c0_13, %c0_14], %16 {strides = array<i32>} : memref<8x1xf32, #tpu.memory_space<vmem>>, vector<8x1xf32>,
    %29 = vector.broadcast %4 : vector<8x1xi32> to vector<8x40xi32>
    %30 = arith.cmpi eq, %8, %29 : vector<8x40xi32>
    %c0_15 = arith.constant 0 : index
    %c0_16 = arith.constant 0 : index
    %31 = vector.load %arg8[%c0_15, %c0_16] : memref<8x1xf32, #tpu.memory_space<vmem>>, vector<8x1xf32>
    %cst_17 = arith.constant 0.000000e+00 : f32
    %32 = vector.broadcast %cst_17 : f32 to vector<8x40xf32>
    %33 = arith.select %30, %3, %32 : vector<8x40xi1>, vector<8x40xf32>
    %cst_18 = arith.constant dense<0.000000e+00> : vector<8xf32>
    %34 = vector.multi_reduction <add>, %33, %cst_18 [1] : vector<8x40xf32> to vector<8xf32>
    %35 = vector.shape_cast %34 : vector<8xf32> to vector<8x1xf32>
    %36 = arith.addf %31, %35 : vector<8x1xf32>
    %c0_19 = arith.constant 0 : index
    %c0_20 = arith.constant 0 : index
    %37 = vector.load %arg8[%c0_19, %c0_20] : memref<8x1xf32, #tpu.memory_space<vmem>>, vector<8x1xf32>
    tpu.vector_store %arg8[%c0_19, %c0_20], %36 {strides = array<i32>} : memref<8x1xf32, #tpu.memory_space<vmem>>, vector<8x1xf32>,
    %c0_i32_21 = arith.constant 0 : i32
    %38 = arith.cmpi eq, %arg0, %c0_i32_21 : i32
    %39 = arith.extui %38 : i1 to i32
    %c0_i32_22 = arith.constant 0 : i32
    %40 = arith.cmpi ne, %39, %c0_i32_22 : i32
    scf.if %40 {
      %c0_23 = arith.constant 0 : index
      %c0_24 = arith.constant 0 : index
      %41 = vector.load %arg6[%c0_23, %c0_24] : memref<8x1xf32, #tpu.memory_space<vmem>>, vector<8x1xf32>
      %c0_25 = arith.constant 0 : index
      %c0_26 = arith.constant 0 : index
      %42 = vector.load %arg7[%c0_25, %c0_26] : memref<8x1xf32, #tpu.memory_space<vmem>>, vector<8x1xf32>
      %43 = math.log %42 : vector<8x1xf32>
      %44 = arith.addf %41, %43 : vector<8x1xf32>
      %c0_27 = arith.constant 0 : index
      %c0_28 = arith.constant 0 : index
      %45 = vector.load %arg8[%c0_27, %c0_28] : memref<8x1xf32, #tpu.memory_space<vmem>>, vector<8x1xf32>
      %46 = arith.subf %44, %45 : vector<8x1xf32>
      %47 = vector.shape_cast %46 : vector<8x1xf32> to vector<1x8x1xf32>
      %cst_29 = arith.constant dense<0.000000e+00> : vector<1xf32>
      %48 = vector.multi_reduction <add>, %47, %cst_29 [1, 2] : vector<1x8x1xf32> to vector<1xf32>
      %49 = vector.shape_cast %48 : vector<1xf32> to vector<1x1x1xf32>
      %50 = vector.extract %49[0, 0, 0] : f32 from vector<1x1x1xf32>
      %cst_30 = arith.constant 1.250000e-01 : f32
      %51 = arith.mulf %50, %cst_30 : f32
      %c0_31 = arith.constant 0 : index
      %c0_32 = arith.constant 0 : index
      %52 = vector.load %arg2[%c0_31, %c0_32] : memref<8x32xf32, #tpu.memory_space<vmem>>, vector<8x32xf32>
      %53 = arith.mulf %52, %52 : vector<8x32xf32>
      %cst_33 = arith.constant dense<0.000000e+00> : vector<8xf32>
      %54 = vector.multi_reduction <add>, %53, %cst_33 [1] : vector<8x32xf32> to vector<8xf32>
      %55 = vector.shape_cast %54 : vector<8xf32> to vector<8x1xf32>
      %cst_34 = arith.constant dense<0.000000e+00> : vector<8x8xf32>
      %56 = tpu.matmul %52, %52, %cst_34 {dimension_numbers = #tpu.dot_dimension_numbers<[1], [1], [0], [0], [0, 0, 1, 0], [], []>} : vector<8x32xf32>, vector<8x32xf32>, vector<8x8xf32> -> vector<8x8xf32>
      %57 = tpu.transpose %55, [1, 0] : vector<8x1xf32> -> vector<1x8xf32>
      %58 = vector.broadcast %55 : vector<8x1xf32> to vector<8x8xf32>
      %59 = vector.broadcast %57 : vector<1x8xf32> to vector<8x8xf32>
      %60 = arith.addf %58, %59 : vector<8x8xf32>
      %cst_35 = arith.constant 2.000000e+00 : f32
      %61 = vector.broadcast %cst_35 : f32 to vector<8x8xf32>
      %62 = arith.mulf %61, %56 : vector<8x8xf32>
      %63 = arith.subf %60, %62 : vector<8x8xf32>
      %cst_36 = arith.constant 9.99999996E-13 : f32
      %64 = vector.broadcast %cst_36 : f32 to vector<8x8xf32>
      %65 = arith.maximumf %63, %64 : vector<8x8xf32>
      %c0_37 = arith.constant 0 : index
      %c0_38 = arith.constant 0 : index
      %66 = vector.load %arg4[%c0_37, %c0_38] : memref<1x8xi32, #tpu.memory_space<vmem>>, vector<1x8xi32>
      %67 = vector.broadcast %4 : vector<8x1xi32> to vector<8x8xi32>
      %68 = vector.broadcast %66 : vector<1x8xi32> to vector<8x8xi32>
      %69 = arith.cmpi eq, %67, %68 : vector<8x8xi32>
      %cst_39 = arith.constant 0xFF800000 : f32
      %70 = vector.broadcast %cst_39 : f32 to vector<8x8xf32>
      %71 = arith.select %69, %65, %70 : vector<8x8xi1>, vector<8x8xf32>
      %cst_40 = arith.constant dense<0xFF800000> : vector<8xf32>
      %72 = vector.multi_reduction <maximumf>, %71, %cst_40 [1] : vector<8x8xf32> to vector<8xf32>
      %73 = vector.shape_cast %72 : vector<8xf32> to vector<8x1xf32>
      %cst_41 = arith.constant 0x7F800000 : f32
      %74 = vector.broadcast %cst_41 : f32 to vector<8x8xf32>
      %75 = arith.select %69, %74, %65 : vector<8x8xi1>, vector<8x8xf32>
      %cst_42 = arith.constant dense<0x7F800000> : vector<8xf32>
      %76 = vector.multi_reduction <minimumf>, %75, %cst_42 [1] : vector<8x8xf32> to vector<8xf32>
      %77 = vector.shape_cast %76 : vector<8xf32> to vector<8x1xf32>
      %78 = math.sqrt %73 : vector<8x1xf32>
      %79 = math.sqrt %77 : vector<8x1xf32>
      %80 = arith.subf %78, %79 : vector<8x1xf32>
      %cst_43 = arith.constant 3.000000e-01 : f32
      %81 = vector.broadcast %cst_43 : f32 to vector<8x1xf32>
      %82 = arith.addf %80, %81 : vector<8x1xf32>
      %cst_44 = arith.constant 0.000000e+00 : f32
      %83 = vector.broadcast %cst_44 : f32 to vector<8x1xf32>
      %84 = arith.maximumf %82, %83 : vector<8x1xf32>
      %85 = vector.shape_cast %84 : vector<8x1xf32> to vector<1x8x1xf32>
      %cst_45 = arith.constant dense<0.000000e+00> : vector<1xf32>
      %86 = vector.multi_reduction <add>, %85, %cst_45 [1, 2] : vector<1x8x1xf32> to vector<1xf32>
      %87 = vector.shape_cast %86 : vector<1xf32> to vector<1x1x1xf32>
      %88 = vector.extract %87[0, 0, 0] : f32 from vector<1x1x1xf32>
      %cst_46 = arith.constant 1.250000e-01 : f32
      %89 = arith.mulf %88, %cst_46 : f32
      %cst_47 = arith.constant 5.000000e-01 : f32
      %90 = arith.mulf %cst_47, %51 : f32
      %cst_48 = arith.constant 5.000000e-01 : f32
      %91 = arith.mulf %cst_48, %89 : f32
      %92 = arith.addf %90, %91 : f32
      %c0_49 = arith.constant 0 : index
      %93 = memref.load %arg5[%c0_49] : memref<3xf32, #tpu.memory_space<smem>>
      memref.store %92, %arg5[%c0_49] : memref<3xf32, #tpu.memory_space<smem>>
      %c1 = arith.constant 1 : index
      %94 = memref.load %arg5[%c1] : memref<3xf32, #tpu.memory_space<smem>>
      memref.store %51, %arg5[%c1] : memref<3xf32, #tpu.memory_space<smem>>
      %c2 = arith.constant 2 : index
      %95 = memref.load %arg5[%c2] : memref<3xf32, #tpu.memory_space<smem>>
      memref.store %89, %arg5[%c2] : memref<3xf32, #tpu.memory_space<smem>>
    } else {
    }
    return
  }
  func.func @transform_0(%arg0: i32) -> (i32, i32) {
    %c0_i32 = arith.constant 0 : i32
    %c0_i32_0 = arith.constant 0 : i32
    return %c0_i32, %arg0 : i32, i32
  }
  func.func @transform_1(%arg0: i32) -> (i32, i32) {
    %c0_i32 = arith.constant 0 : i32
    %c0_i32_0 = arith.constant 0 : i32
    %c0_i32_1 = arith.constant 0 : i32
    return %c0_i32, %c0_i32_0 : i32, i32
  }
  func.func @transform_2(%arg0: i32) -> (i32, i32) {
    %c0_i32 = arith.constant 0 : i32
    %c0_i32_0 = arith.constant 0 : i32
    %c0_i32_1 = arith.constant 0 : i32
    return %c0_i32, %c0_i32_0 : i32, i32
  }
  func.func @transform_3(%arg0: i32) -> (i32, i32) {
    %c0_i32 = arith.constant 0 : i32
    %c0_i32_0 = arith.constant 0 : i32
    %c0_i32_1 = arith.constant 0 : i32
    return %c0_i32, %c0_i32_0 : i32, i32
  }
  func.func @transform_4(%arg0: i32) -> i32 {
    %c0_i32 = arith.constant 0 : i32
    %c0_i32_0 = arith.constant 0 : i32
    return %c0_i32 : i32
  }
}

</mosaic_0001>

<llo_original>
// kernel: tpu_custom_call.1
$region0: #{tpu_custom_call.1}
  #allocation0 [shape = 'u32[]', space=smem, size = 0x4, offset = 0x4, fixed_abs, tag = 'smem constant byte address 0x4 - core index']
  #allocation1 [shape = 'u32[144,128]{1,0:T(1,128)}', space=vmem, size = 0x12000, scoped, tag = 'internal scratch']
  #allocation2 [shape = 'f32[8,1]{1,0:T(8,128)}', space=vmem, size = 0x1000, scoped, tag = 'scratch operand']
  #allocation3 [shape = 'f32[8,1]{1,0:T(8,128)}', space=vmem, size = 0x1000, scoped, tag = 'scratch operand']
  #allocation4 [shape = 'f32[8,1]{1,0:T(8,128)}', space=vmem, size = 0x1000, scoped, tag = 'scratch operand']
  %s0 = inlined_call_operand.vmem [shape: f32[8,40], index: 0, kind: input, shape index: {}]
  %s1 = inlined_call_operand.hbm [shape: f32[8,32], index: 1, kind: input, shape index: {}]
  %s2 = inlined_call_operand.vmem [shape: s32[8,1], index: 2, kind: input, shape index: {}]
  %s3 = inlined_call_operand.vmem [shape: s32[1,8], index: 3, kind: input, shape index: {}]
  %s4 = inlined_call_operand.hbm [shape: f32[3], index: 4, kind: output, shape index: {}]
  %s5 = sld [smem:[#allocation0]]
  $region38: #{tpu_custom_call.1} parent=0
    _
  %s7 = ssub.s32 1, %s5
  %s8 = scalar_select 0, %s7, %s5
  $region1: #{tpu_custom_call.1} parent=0
    #allocation5 [shape = 'u8[4096]{0}', space=vmem, size = 0x1000, scoped, tag = 'input window, operand 1, single buffered']
    #allocation6 [shape = 's32[1]{0}', space=sflag, size = 0x4, scoped, tag = 'scoped memory for tpu_custom_call.1']
    #allocation7 [shape = 's32[1]{0}', space=sflag, size = 0x4, scoped, tag = 'scoped memory for tpu_custom_call.1']
    #allocation8 [shape = 'u8[512]{0}', space=smem, size = 0x200, scoped, tag = 'output window, operand 0, single buffered']
    %9 = vsyncpa [#allocation6], 0
    %10 = vsyncpa [#allocation7], 0
    // Predicated region
    $region2: #{tpu_custom_call.1} parent=1 // pred_check
      _
    $region3: #{tpu_custom_call.1} parent=1 // pred_check_branch
      %12 = sbr.rel (0) target = $region5
    $region4: #{tpu_custom_call.1} parent=1 // pred_region
      _
    $region5: #{tpu_custom_call.1} parent=1 // pred_fallthru
      _
    // Predicated region
    $region6: #{tpu_custom_call.1} parent=1 // pred_check
      _
    $region7: #{tpu_custom_call.1} parent=1 // pred_check_branch
      %14 = sbr.rel (0) target = $region9
    $region8: #{tpu_custom_call.1} parent=1 // pred_region
      %s16 = ssub.s32 128, 128
      %17 = vsyncadd [#allocation6], %s16
      %s19 = sshll.u32 [#allocation5], 4
      %s20 = int_to_ptr.vmem [resolvable:$true] %s19
      %22 = dma.hbm_to_vmem [thread:$0]  %s1, 128, %s20, [#allocation6]
    $region9: #{tpu_custom_call.1} parent=1 // pred_fallthru
      _
    // Predicated region
    $region10: #{tpu_custom_call.1} parent=1 // pred_check
      _
    $region11: #{tpu_custom_call.1} parent=1 // pred_check_branch
      %24 = sbr.rel (0) target = $region13
    $region12: #{tpu_custom_call.1} parent=1 // pred_region
      _
    $region13: #{tpu_custom_call.1} parent=1 // pred_fallthru
      _
    // Predicated region
    $region14: #{tpu_custom_call.1} parent=1 // pred_check
      _
    $region15: #{tpu_custom_call.1} parent=1 // pred_check_branch
      %26 = sbr.rel (0) target = $region17
    $region16: #{tpu_custom_call.1} parent=1 // pred_region
      _
    $region17: #{tpu_custom_call.1} parent=1 // pred_fallthru
      _
    // Predicated region
    $region18: #{tpu_custom_call.1} parent=1 // pred_check
      _
    $region19: #{tpu_custom_call.1} parent=1 // pred_check_branch
      %28 = sbr.rel (0) target = $region21
    $region20: #{tpu_custom_call.1} parent=1 // pred_region
      %29 = dma.done [#allocation6], 128
    $region21: #{tpu_custom_call.1} parent=1 // pred_fallthru
      _
    %p30 = scmp.eq.s32.totalorder 0, 0
    // Predicated region
    $region22: #{tpu_custom_call.1} parent=1 // pred_check
      %p31 = pneg %p30
    $region23: #{tpu_custom_call.1} parent=1 // pred_check_branch
      %33 = sbr.rel (%p31) target = $region25
    $region24: #{tpu_custom_call.1} parent=1 // pred_region
      %vm34 = vcmask 7168
      %35 = vst.msk [vmem:[#allocation2] sm:$0xff] %vm34, -inf
      %36 = vst.msk [vmem:[#allocation3] sm:$0xff] %vm34, 0.0
      %37 = vst.msk [vmem:[#allocation4] sm:$0xff] %vm34, 0.0
    $region25: #{tpu_custom_call.1} parent=1 // pred_fallthru
      _
    %v38 = vld [vmem:[%s0] sm:$0xff]
    %v39 = vld [vmem:[%s2] sm:$0xff]
    %v40 = vlaneseq
    %v41 = vand.u32 %v40, 127
    %s42 = smul.u32 0, 40
    %v43 = vstv %s42
    %v44 = vadd.s32 %v41, %v43
    %vm45 = vcmp.lt.s32.totalorder %v44, 40
    %v46 = vsel %vm45, %v38, -inf
    %v47 = vld [vmem:[#allocation2] sm:$0xff]
    %vm48 = vcmask 326656
    %v49 = vsel %vm48, %v46, -inf
    %50 = vmax.xlane.f32.xlu0 %v49
    %v51 = vpop.xlane.xlu0 %50
    %v52 = vmax.f32 %v47, %v51
    %v53 = vsub.f32 %v47, %v52
    %v54 = vmul.f32 %v53, 1.442695
    %v55 = vpow.pop %v54
    %v56 = vld [vmem:[#allocation3] sm:$0xff]
    %v57 = vmul.f32 %v56, %v55
    %59 = vset.pattern.permute.xlu0 0
    %60 = vperm.xlu0 %59, %v52
    %v61 = vpop.permute.xlu0 %60
    %v63 = vsub.f32 %v46, %v61
    %v64 = vmul.f32 %v63, 1.442695
    %v65 = vpow.pop %v64
    %v66 = vsel %vm48, %v65, 0.0
    %67 = vadd.xlane.f32.xlu0 %v66
    %v68 = vpop.xlane.xlu0 %67
    %v69 = vadd.f32 %v57, %v68
    %vm70 = vcmask 7168
    %71 = vst.msk [vmem:[#allocation3] sm:$0xff] %vm70, %v69
    %72 = vst.msk [vmem:[#allocation2] sm:$0xff] %vm70, %v52
    %73 = vset.pattern.permute.xlu0 0
    %74 = vperm.xlu0 %73, %v39
    %v75 = vpop.permute.xlu0 %74
    %vm76 = vcmp.eq.s32.totalorder %v44, %v75
    %v77 = vld [vmem:[#allocation4] sm:$0xff]
    %v78 = vsel %vm76, %v38, 0.0
    %v79 = vsel %vm48, %v78, 0.0
    %80 = vadd.xlane.f32.xlu0 %v79
    %v81 = vpop.xlane.xlu0 %80
    %v82 = vadd.f32 %v77, %v81
    %83 = vst.msk [vmem:[#allocation4] sm:$0xff] %vm70, %v82
    // Predicated region
    $region26: #{tpu_custom_call.1} parent=1 // pred_check
      %p84 = pneg %p30
    $region27: #{tpu_custom_call.1} parent=1 // pred_check_branch
      %86 = sbr.rel (%p84) target = $region29
    $region28: #{tpu_custom_call.1} parent=1 // pred_region
      %v87 = vld [vmem:[#allocation2] sm:$0xff]
      %v88 = vld [vmem:[#allocation3] sm:$0xff]
      %v89 = vlog2.pop %v88
      %v90 = vmul.f32 %v89, 0.6931472
      %v91 = vadd.f32 %v87, %v90
      %v92 = vld [vmem:[#allocation4] sm:$0xff]
      %v93 = vsub.f32 %v91, %v92
      %v94 = vsel %vm70, %v93, 0.0
      %95 = vadd.xlane.f32.xlu0 %v94
      %v96 = vpop.xlane.xlu0 %95
      %v97 = vrot.slane %v96, 4
      %v98 = vadd.f32 %v96, %v97
      %v99 = vrot.slane %v98, 2
      %v100 = vadd.f32 %v98, %v99
      %v101 = vrot.slane %v100, 1
      %v102 = vadd.f32 %v100, %v101
      %s103 = vtos %v102
      %s104 = smul.f32 %s103, 0.125
      %v105 = vld [vmem:[#allocation5] sm:$0xff]
      %v106 = vmul.f32 %v105, %v105
      %vm107 = vcmask 261120
      %v108 = vsel %vm107, %v106, 0.0
      %109 = vadd.xlane.f32.xlu0 %v108
      %v110 = vpop.xlane.xlu0 %109
      %v112 = vsel %vm107, %v105, 0
      %114 = vmatprep.subr.mxu0 0.0
      %115 = vmatpush1.xpose.msra.mxu0 %v112
      %116 = vmatprep.subr.mxu0 0.0
      %117 = vmatpush1.xpose.msra.mxu0 0.0
      %118 = vmatprep.subr.mxu0 0.0
      %119 = vmatpush1.xpose.msra.mxu0 0.0
      %120 = vmatprep.subr.mxu0 0.0
      %121 = vmatpush1.xpose.msra.mxu0 0.0
      %122 = vmatprep.subr.mxu0 0.0
      %123 = vmatpush1.xpose.msra.mxu0 0.0
      %124 = vmatprep.subr.mxu0 0.0
      %125 = vmatpush1.xpose.msra.mxu0 0.0
      %126 = vmatprep.subr.mxu0 0.0
      %127 = vmatpush1.xpose.msra.mxu0 0.0
      %128 = vmatprep.subr.mxu0 0.0
      %129 = vmatpush1.xpose.msra.mxu0 0.0
      %130 = vmatprep.subr.mxu0 0.0
      %131 = vmatpush1.xpose.msra.mxu0 0.0
      %132 = vmatprep.subr.mxu0 0.0
      %133 = vmatpush1.xpose.msra.mxu0 0.0
      %134 = vmatprep.subr.mxu0 0.0
      %135 = vmatpush1.xpose.msra.mxu0 0.0
      %136 = vmatprep.subr.mxu0 0.0
      %137 = vmatpush1.xpose.msra.mxu0 0.0
      %138 = vmatprep.subr.mxu0 0.0
      %139 = vmatpush1.xpose.msra.mxu0 0.0
      %140 = vmatprep.subr.mxu0 0.0
      %141 = vmatpush1.xpose.msra.mxu0 0.0
      %142 = vmatprep.subr.mxu0 0.0
      %143 = vmatpush1.xpose.msra.mxu0 0.0
      %144 = vmatprep.subr.mxu0 0.0
      %145 = vmatpush1.xpose.msra.mxu0 0.0
      %146 = vmatprep.subr.mxu0 0.0
      %147 = vmatpush1.xpose.msra.mxu0 0.0
      %148 = vmatprep.subr.mxu0 0.0
      %149 = vmatpush1.xpose.msra.mxu0 0.0
      %150 = vmatprep.subr.mxu0 0.0
      %151 = vmatpush1.xpose.msra.mxu0 0.0
      %152 = vmatprep.subr.mxu0 0.0
      %153 = vmatpush1.xpose.msra.mxu0 0.0
      %154 = vmatprep.subr.mxu0 0.0
      %155 = vmatpush1.xpose.msra.mxu0 0.0
      %156 = vmatprep.subr.mxu0 0.0
      %157 = vmatpush1.xpose.msra.mxu0 0.0
      %158 = vmatprep.subr.mxu0 0.0
      %159 = vmatpush1.xpose.msra.mxu0 0.0
      %160 = vmatprep.subr.mxu0 0.0
      %161 = vmatpush1.xpose.msra.mxu0 0.0
      %162 = vmatprep.subr.mxu0 0.0
      %163 = vmatpush1.xpose.msra.mxu0 0.0
      %164 = vmatprep.subr.mxu0 0.0
      %165 = vmatpush1.xpose.msra.mxu0 0.0
      %166 = vmatprep.subr.mxu0 0.0
      %167 = vmatpush1.xpose.msra.mxu0 0.0
      %168 = vmatprep.subr.mxu0 0.0
      %169 = vmatpush1.xpose.msra.mxu0 0.0
      %170 = vmatprep.subr.mxu0 0.0
      %171 = vmatpush1.xpose.msra.mxu0 0.0
      %172 = vmatprep.subr.mxu0 0.0
      %173 = vmatpush1.xpose.msra.mxu0 0.0
      %174 = vmatprep.subr.mxu0 0.0
      %175 = vmatpush1.xpose.msra.mxu0 0.0
      %176 = vmatprep.subr.mxu0 0.0
      %177 = vmatpush1.xpose.msra.mxu0 0.0
      %178 = vmatprep.mubr.f32.mxu0 0.0
      %179 = vmatmul.mubr.f32.gmra.mrb[0].mxu0 %v112
      %v180 = vpop.f32.mrb[0].mxu0
      %v181 = vadd.f32 0.0, %v180
      %v182 = vpop.f32.mrb[0].mxu0
      %183 = vdwg.mxu0
      %184 = vxpose.xlu0.b32.start [1/16] %v110, 128
      %185 = vxpose.xlu0.b32.cont [2/16] 0.0, 128
      %186 = vxpose.xlu0.b32.cont [3/16] 0.0, 128
      %187 = vxpose.xlu0.b32.cont [4/16] 0.0, 128
      %188 = vxpose.xlu0.b32.cont [5/16] 0.0, 128
      %189 = vxpose.xlu0.b32.cont [6/16] 0.0, 128
      %190 = vxpose.xlu0.b32.cont [7/16] 0.0, 128
      %191 = vxpose.xlu0.b32.cont [8/16] 0.0, 128
      %192 = vxpose.xlu0.b32.cont [9/16] 0.0, 128
      %193 = vxpose.xlu0.b32.cont [10/16] 0.0, 128
      %194 = vxpose.xlu0.b32.cont [11/16] 0.0, 128
      %195 = vxpose.xlu0.b32.cont [12/16] 0.0, 128
      %196 = vxpose.xlu0.b32.cont [13/16] 0.0, 128
      %197 = vxpose.xlu0.b32.cont [14/16] 0.0, 128
      %198 = vxpose.xlu0.b32.cont [15/16] 0.0, 128
      %199 = vxpose.xlu0.b32.end [16/16] 0.0, 128
      %v200 = vpop.trf.xlu0
      %v201 = vpop.trf.xlu0
      %v202 = vpop.trf.xlu0
      %v203 = vpop.trf.xlu0
      %v204 = vpop.trf.xlu0
      %v205 = vpop.trf.xlu0
      %v206 = vpop.trf.xlu0
      %v207 = vpop.trf.xlu0
      %v208 = vpop.trf.xlu0
      %v209 = vpop.trf.xlu0
      %v210 = vpop.trf.xlu0
      %v211 = vpop.trf.xlu0
      %v212 = vpop.trf.xlu0
      %v213 = vpop.trf.xlu0
      %v214 = vpop.trf.xlu0
      %v215 = vpop.trf.xlu0
      %v216 = vlaneseq
      %v217 = vshrl.u32 %v216, 7
      %v218 = vsub.s32 0, %v217
      %v219 = vrot.slane %v200, %v218
      %v220 = vadd.f32 %v110, %v219
      %v221 = vmul.f32 %v181, 2.0
      %v222 = vsub.f32 %v220, %v221
      %v223 = vmax.f32 %v222, 1e-12
      %v224 = vld [vmem:[%s3] sm:$0x1]
      %v225 = vlaneseq
      %v226 = vshrl.u32 %v225, 7
      %v227 = vsub.s32 0, %v226
      %v228 = vrot.slane %v224, %v227
      %vm229 = vcmp.eq.s32.totalorder %v75, %v228
      %v230 = vsel %vm229, %v223, -inf
      %vm231 = vcmask 64512
      %v232 = vsel %vm231, %v230, -inf
      %233 = vmax.xlane.f32.xlu0 %v232
      %v234 = vpop.xlane.xlu0 %233
      %v235 = vsel %vm229, inf, %v223
      %v236 = vsel %vm231, %v235, inf
      %237 = vmin.xlane.f32.xlu0 %v236
      %v238 = vpop.xlane.xlu0 %237
      %v239 = vrsqrt.pop %v234
      %v240 = vmul.f32 %v234, %v239
      %vm241 = vcmp.eq.f32.partialorder %v234, inf
      %v242 = vsel %vm241, %v234, %v240
      %vm243 = vcmp.eq.f32.partialorder %v234, 0.0
      %v244 = vand.u32 %v234, 2147483648
      %v245 = vsel %vm243, %v244, %v242
      %v246 = vrsqrt.pop %v238
      %v247 = vmul.f32 %v238, %v246
      %vm248 = vcmp.eq.f32.partialorder %v238, inf
      %v249 = vsel %vm248, %v238, %v247
      %vm250 = vcmp.eq.f32.partialorder %v238, 0.0
      %v251 = vand.u32 %v238, 2147483648
      %v252 = vsel %vm250, %v251, %v249
      %v253 = vsub.f32 %v245, %v252
      %v254 = vadd.f32 %v253, 0.3
      %v255 = vmax.f32 %v254, 0.0
      %v256 = vsel %vm70, %v255, 0.0
      %257 = vadd.xlane.f32.xlu0 %v256
      %v258 = vpop.xlane.xlu0 %257
      %v259 = vrot.slane %v258, 4
      %v260 = vadd.f32 %v258, %v259
      %v261 = vrot.slane %v260, 2
      %v262 = vadd.f32 %v260, %v261
      %v263 = vrot.slane %v262, 1
      %v264 = vadd.f32 %v262, %v263
      %s265 = vtos %v264
      %s266 = smul.f32 %s265, 0.125
      %s267 = smul.f32 %s104, 0.5
      %s268 = smul.f32 %s266, 0.5
      %s269 = sadd.f32 %s267, %s268
      %s270 = scalar_lea.smem [#allocation8], 0
      %271 = sst [smem:[%s270]] %s269
      %s272 = scalar_lea.smem [#allocation8], 1
      %273 = sst [smem:[%s272]] %s104
      %s274 = scalar_lea.smem [#allocation8], 2
      %275 = sst [smem:[%s274]] %s266
    $region29: #{tpu_custom_call.1} parent=1 // pred_fallthru
      _
    // Predicated region
    $region30: #{tpu_custom_call.1} parent=1 // pred_check
      _
    $region31: #{tpu_custom_call.1} parent=1 // pred_check_branch
      %277 = sbr.rel (0) target = $region33
    $region32: #{tpu_custom_call.1} parent=1 // pred_region
      %s279 = ssub.s32 16, 16
      %280 = vsyncadd [#allocation7], %s279
      %283 = dma.smem_to_hbm [#allocation8], 16, %s4, [#allocation7]
    $region33: #{tpu_custom_call.1} parent=1 // pred_fallthru
      _
    // Predicated region
    $region34: #{tpu_custom_call.1} parent=1 // pred_check
      _
    $region35: #{tpu_custom_call.1} parent=1 // pred_check_branch
      %285 = sbr.rel (0) target = $region37
    $region36: #{tpu_custom_call.1} parent=1 // pred_region
      %286 = dma.done [#allocation7], 16
    $region37: #{tpu_custom_call.1} parent=1 // pred_fallthru
      _
    %287 = sfence
    %288 = vsyncpa [#allocation6], 1
    %289 = vsyncpa [#allocation7], 1

</llo_original>
